<compile_context>
chip_gen: v6e
topology: v6e:2x2x1
jax: 0.10.0
libtpu: 0.0.40
codegen_flags: <defaults>
</compile_context>

<pallas_src>
import jax
import jax.numpy as jnp
from jax.experimental import pallas as pl
from jax.experimental.pallas import tpu as pltpu


def _recip(x):
    """EUP approximate reciprocal + one Newton step (~f32-exact)."""
    r = pl.reciprocal(x, approx=True)
    return r * (2.0 - x * r)


def _make_kernel(output_space: str):
    """Elementwise color-conversion kernel. Refs are (1, 3, TP, 128) tiles."""

    def kernel(x_ref, o_ref):
        # Read channels straight from the ref -> three (TP, 128) slabs.
        r = x_ref[0, 0]
        g = x_ref[0, 1]
        b = x_ref[0, 2]

        if output_space == "hsv":
            max_rgb = jnp.maximum(jnp.maximum(r, g), b)
            min_rgb = jnp.minimum(jnp.minimum(r, g), b)
            diff = max_rgb - min_rgb
            v = max_rgb

            safe_max = jnp.where(max_rgb > 0, max_rgb, 1.0)
            safe_diff = jnp.where(diff > 0, diff, 1.0)
            inv_max = _recip(safe_max)
            inv_diff = _recip(safe_diff)

            s = jnp.where(max_rgb > 0, diff * inv_max, jnp.zeros_like(max_rgb))

            # ((g-b)/diff) % 6 with the argument guaranteed in [-1, 1]:
            # conditional +6 is exact and avoids the mod (div/floor/mul/sub).
            hr = (g - b) * inv_diff
            hr = jnp.where(hr < 0, hr + 6.0, hr)

            nonzero = diff > 0
            h = jnp.zeros_like(max_rgb)
            # Sequential masked overrides, matching PyTorch's in-place
            # h[mask] = ... ordering (later masks win).
            h = jnp.where((max_rgb == r) & nonzero, hr, h)
            h = jnp.where((max_rgb == g) & nonzero, (b - r) * inv_diff + 2.0, h)
            h = jnp.where((max_rgb == b) & nonzero, (r - g) * inv_diff + 4.0, h)
            h = h * (1.0 / 6.0)

            o_ref[0, 0] = h
            o_ref[0, 1] = s
            o_ref[0, 2] = v

        elif output_space == "yuv":
            o_ref[0, 0] = 0.299 * r + 0.587 * g + 0.114 * b
            o_ref[0, 1] = -0.14713 * r - 0.28886 * g + 0.436 * b + 0.5
            o_ref[0, 2] = 0.615 * r - 0.51499 * g - 0.10001 * b + 0.5

        elif output_space == "lab":
            # sRGB gamma expansion.
            def lin(c):
                return jnp.where(c > 0.04045,
                                 jnp.power((c + 0.055) * (1.0 / 1.055), 2.4),
                                 c * (1.0 / 12.92))

            rl, gl, bl = lin(r), lin(g), lin(b)

            # 3x3 XYZ matrix with the white-point normalization folded into
            # the coefficients (X /= 0.95047, Z /= 1.08883) at trace time.
            xn = ((0.4124564 / 0.95047) * rl + (0.3575761 / 0.95047) * gl
                  + (0.1804375 / 0.95047) * bl)
            yn = 0.2126729 * rl + 0.7151522 * gl + 0.0721750 * bl
            zn = ((0.0193339 / 1.08883) * rl + (0.1191920 / 1.08883) * gl
                  + (0.9503041 / 1.08883) * bl)

            def f(t):
                safe_t = jnp.where(t > 0.008856, t, 1.0)
                return jnp.where(t > 0.008856,
                                 jnp.power(safe_t, 1.0 / 3.0),
                                 7.787 * t + 16.0 / 116.0)

            fx, fy, fz = f(xn), f(yn), f(zn)

            # Output scaling folded: L/100, (a+128)/255, (b+128)/255.
            o_ref[0, 0] = 1.16 * fy - 0.16
            o_ref[0, 1] = (500.0 / 255.0) * (fx - fy) + (128.0 / 255.0)
            o_ref[0, 2] = (200.0 / 255.0) * (fy - fz) + (128.0 / 255.0)

        else:
            raise NotImplementedError(output_space)

    return kernel


def color_space_convert(image: jax.Array,
                        input_space: str = "rgb",
                        output_space: str = "hsv") -> jax.Array:
    """Pallas equivalent of ColorSpaceConverter.forward. image: (B, 3, H, W)."""
    input_space = input_space.lower()
    output_space = output_space.lower()
    supported = ["rgb", "hsv", "lab", "yuv", "hls"]
    if input_space not in supported or output_space not in supported:
        raise ValueError(f"spaces must be one of {supported}")
    if input_space == output_space:
        return image
    if input_space != "rgb":
        raise NotImplementedError(f"Conversion from {input_space} not implemented")
    if output_space not in ("hsv", "yuv", "lab"):
        raise NotImplementedError(f"Conversion to {output_space} not implemented")

    B, C, H, W = image.shape
    assert C == 3, "expected 3-channel RGB input"

    LANE = 128
    HW = H * W
    P0 = pl.cdiv(HW, LANE)          # rows of 128 pixels needed per image

    TP_MAX = 1024                   # 3 * 1024 * 128 * 4 B = 1.5 MiB per block
    if P0 > TP_MAX:
        TP = TP_MAX
        num_tiles = pl.cdiv(P0, TP)
    elif B == 1 and P0 >= 16:
        # Ensure >= 2 parallel grid steps so both v7x TensorCores are fed.
        TP = ((pl.cdiv(P0, 2) + 7) // 8) * 8
        num_tiles = 2
    else:
        TP = P0                     # block dim == full dim (allowed even if <8)
        num_tiles = 1
    P = TP * num_tiles
    HW_pad = P * LANE

    # Free reshape (no transpose); zero-pad the flattened spatial axis only if
    # needed.  Zeros are safe for every conversion path (no div-by-zero / NaN).
    x = image.reshape(B, 3, HW)
    if HW_pad != HW:
        x = jnp.pad(x, ((0, 0), (0, 0), (0, HW_pad - HW)))
    x = x.reshape(B, 3, P, LANE)

    out = pl.pallas_call(
        _make_kernel(output_space),
        out_shape=jax.ShapeDtypeStruct((B, 3, P, LANE), image.dtype),
        grid=(B, num_tiles),
        in_specs=[pl.BlockSpec((1, 3, TP, LANE), lambda bi, pi: (bi, 0, pi, 0))],
        out_specs=pl.BlockSpec((1, 3, TP, LANE), lambda bi, pi: (bi, 0, pi, 0)),
        compiler_params=pltpu.CompilerParams(
            dimension_semantics=("parallel", "parallel"),
            vmem_limit_bytes=48 * 1024 * 1024),
    )(x)

    out = out.reshape(B, 3, HW_pad)
    if HW_pad != HW:
        out = out[:, :, :HW]
    return out.reshape(B, 3, H, W)


def _reference(image, output_space):
    """Pure-JAX mirror of the PyTorch module (for correctness checks)."""
    r, g, b = image[:, 0], image[:, 1], image[:, 2]
    if output_space == "hsv":
        mx = jnp.max(image, axis=1)
        mn = jnp.min(image, axis=1)
        diff = mx - mn
        v = mx
        s = jnp.where(mx > 0, diff / jnp.where(mx > 0, mx, 1.0), 0.0)
        sd = jnp.where(diff > 0, diff, 1.0)
        h = jnp.zeros_like(mx)
        h = jnp.where((mx == r) & (diff > 0), jnp.mod((g - b) / sd, 6.0), h)
        h = jnp.where((mx == g) & (diff > 0), (b - r) / sd + 2.0, h)
        h = jnp.where((mx == b) & (diff > 0), (r - g) / sd + 4.0, h)
        return jnp.stack([h / 6.0, s, v], axis=1)
    if output_space == "yuv":
        y = 0.299 * r + 0.587 * g + 0.114 * b
        u = -0.14713 * r - 0.28886 * g + 0.436 * b + 0.5
        vv = 0.615 * r - 0.51499 * g - 0.10001 * b + 0.5
        return jnp.stack([y, u, vv], axis=1)
    if output_space == "lab":
        rgb_lin = jnp.where(image > 0.04045,
                            jnp.power((image + 0.055) / 1.055, 2.4),
                            image / 12.92)
        T = jnp.array([[0.4124564, 0.3575761, 0.1804375],
                       [0.2126729, 0.7151522, 0.0721750],
                       [0.0193339, 0.1191920, 0.9503041]], dtype=image.dtype)
        xyz = jnp.einsum("ij,bjhw->bihw", T, rgb_lin)
        ref_white = jnp.array([0.95047, 1.0, 1.08883],
                              dtype=image.dtype).reshape(1, 3, 1, 1)
        t = xyz / ref_white
        ft = jnp.where(t > 0.008856,
                       jnp.power(jnp.where(t > 0.008856, t, 1.0), 1.0 / 3.0),
                       7.787 * t + 16.0 / 116.0)
        L = 116.0 * ft[:, 1] - 16.0
        a = 500.0 * (ft[:, 0] - ft[:, 1])
        bb = 200.0 * (ft[:, 1] - ft[:, 2])
        return jnp.stack([L / 100.0, (a + 128.0) / 255.0, (bb + 128.0) / 255.0],
                         axis=1)
    raise NotImplementedError(output_space)


if __name__ == "__main__":
    key = jax.random.PRNGKey(0)
    # Small RGB image batch in [0, 1], NCHW like the PyTorch module expects.
    x = jax.random.uniform(key, (2, 3, 16, 16), dtype=jnp.float32)

    for space in ("hsv", "yuv", "lab"):
        out = jax.block_until_ready(color_space_convert(x, "rgb", space))
        ref = _reference(x, space)
        assert out.shape == x.shape
        assert bool(jnp.all(jnp.isfinite(out))), space
        assert bool(jnp.allclose(out, ref, atol=2e-4, rtol=2e-4)), space

    # Identity path (input_space == output_space) returns the input unchanged.
    assert color_space_convert(x, "rgb", "rgb").shape == x.shape

    print("KERNEL_OK")
</pallas_src>

<mosaic_0001>
module attributes {stable_mosaic.version = 11 : i64} {
  func.func @kernel(%arg0: i32, %arg1: i32, %arg2: memref<1x3x2x128xf32, #tpu.memory_space<vmem>>, %arg3: memref<1x3x2x128xf32, #tpu.memory_space<vmem>>) attributes {dimension_semantics = [#tpu.dimension_semantics<parallel>, #tpu.dimension_semantics<parallel>], iteration_bounds = array<i64: 2, 1>, scalar_prefetch = 0 : i64, scratch_operands = 0 : i64, tpu.core_type = #tpu.core_type<tc>, window_params = [{transform_indices = @transform_0, window_bounds = array<i64: 1, 3, 2, 128>}, {transform_indices = @transform_1, window_bounds = array<i64: 1, 3, 2, 128>}]} {
    %c0 = arith.constant 0 : index
    %c0_0 = arith.constant 0 : index
    %c0_1 = arith.constant 0 : index
    %c0_2 = arith.constant 0 : index
    %0 = vector.load %arg2[%c0, %c0_0, %c0_1, %c0_2] : memref<1x3x2x128xf32, #tpu.memory_space<vmem>>, vector<1x1x2x128xf32>
    %1 = vector.shape_cast %0 : vector<1x1x2x128xf32> to vector<2x128xf32>
    %c0_3 = arith.constant 0 : index
    %c1 = arith.constant 1 : index
    %c0_4 = arith.constant 0 : index
    %c0_5 = arith.constant 0 : index
    %2 = vector.load %arg2[%c0_3, %c1, %c0_4, %c0_5] : memref<1x3x2x128xf32, #tpu.memory_space<vmem>>, vector<1x1x2x128xf32>
    %3 = vector.shape_cast %2 : vector<1x1x2x128xf32> to vector<2x128xf32>
    %c0_6 = arith.constant 0 : index
    %c2 = arith.constant 2 : index
    %c0_7 = arith.constant 0 : index
    %c0_8 = arith.constant 0 : index
    %4 = vector.load %arg2[%c0_6, %c2, %c0_7, %c0_8] : memref<1x3x2x128xf32, #tpu.memory_space<vmem>>, vector<1x1x2x128xf32>
    %5 = vector.shape_cast %4 : vector<1x1x2x128xf32> to vector<2x128xf32>
    %6 = arith.maximumf %1, %3 : vector<2x128xf32>
    %7 = arith.maximumf %6, %5 : vector<2x128xf32>
    %8 = arith.minimumf %1, %3 : vector<2x128xf32>
    %9 = arith.minimumf %8, %5 : vector<2x128xf32>
    %10 = arith.subf %7, %9 : vector<2x128xf32>
    %cst = arith.constant 0.000000e+00 : f32
    %11 = vector.broadcast %cst : f32 to vector<2x128xf32>
    %12 = arith.cmpf ogt, %7, %11 : vector<2x128xf32>
    %cst_9 = arith.constant 1.000000e+00 : f32
    %13 = vector.broadcast %cst_9 : f32 to vector<2x128xf32>
    %14 = arith.select %12, %7, %13 : vector<2x128xi1>, vector<2x128xf32>
    %cst_10 = arith.constant 0.000000e+00 : f32
    %15 = vector.broadcast %cst_10 : f32 to vector<2x128xf32>
    %16 = arith.cmpf ogt, %10, %15 : vector<2x128xf32>
    %cst_11 = arith.constant 1.000000e+00 : f32
    %17 = vector.broadcast %cst_11 : f32 to vector<2x128xf32>
    %18 = arith.select %16, %10, %17 : vector<2x128xi1>, vector<2x128xf32>
    %19 = tpu.reciprocal %14 {approx = true} : vector<2x128xf32> -> vector<2x128xf32>
    %20 = arith.mulf %14, %19 : vector<2x128xf32>
    %cst_12 = arith.constant 2.000000e+00 : f32
    %21 = vector.broadcast %cst_12 : f32 to vector<2x128xf32>
    %22 = arith.subf %21, %20 : vector<2x128xf32>
    %23 = arith.mulf %19, %22 : vector<2x128xf32>
    %24 = tpu.reciprocal %18 {approx = true} : vector<2x128xf32> -> vector<2x128xf32>
    %25 = arith.mulf %18, %24 : vector<2x128xf32>
    %cst_13 = arith.constant 2.000000e+00 : f32
    %26 = vector.broadcast %cst_13 : f32 to vector<2x128xf32>
    %27 = arith.subf %26, %25 : vector<2x128xf32>
    %28 = arith.mulf %24, %27 : vector<2x128xf32>
    %cst_14 = arith.constant 0.000000e+00 : f32
    %29 = vector.broadcast %cst_14 : f32 to vector<2x128xf32>
    %30 = arith.cmpf ogt, %7, %29 : vector<2x128xf32>
    %31 = arith.mulf %10, %23 : vector<2x128xf32>
    %cst_15 = arith.constant 0.000000e+00 : f32
    %32 = vector.broadcast %cst_15 : f32 to vector<2x128xf32>
    %33 = arith.select %30, %31, %32 : vector<2x128xi1>, vector<2x128xf32>
    %34 = arith.subf %3, %5 : vector<2x128xf32>
    %35 = arith.mulf %34, %28 : vector<2x128xf32>
    %cst_16 = arith.constant 0.000000e+00 : f32
    %36 = vector.broadcast %cst_16 : f32 to vector<2x128xf32>
    %37 = arith.cmpf olt, %35, %36 : vector<2x128xf32>
    %cst_17 = arith.constant 6.000000e+00 : f32
    %38 = vector.broadcast %cst_17 : f32 to vector<2x128xf32>
    %39 = arith.addf %35, %38 : vector<2x128xf32>
    %40 = arith.select %37, %39, %35 : vector<2x128xi1>, vector<2x128xf32>
    %cst_18 = arith.constant 0.000000e+00 : f32
    %41 = vector.broadcast %cst_18 : f32 to vector<2x128xf32>
    %42 = arith.cmpf ogt, %10, %41 : vector<2x128xf32>
    %cst_19 = arith.constant 0.000000e+00 : f32
    %43 = vector.broadcast %cst_19 : f32 to vector<2x128xf32>
    %44 = arith.cmpf oeq, %7, %1 : vector<2x128xf32>
    %45 = arith.andi %44, %42 : vector<2x128xi1>
    %46 = arith.select %45, %40, %43 : vector<2x128xi1>, vector<2x128xf32>
    %47 = arith.cmpf oeq, %7, %3 : vector<2x128xf32>
    %48 = arith.andi %47, %42 : vector<2x128xi1>
    %49 = arith.subf %5, %1 : vector<2x128xf32>
    %50 = arith.mulf %49, %28 : vector<2x128xf32>
    %cst_20 = arith.constant 2.000000e+00 : f32
    %51 = vector.broadcast %cst_20 : f32 to vector<2x128xf32>
    %52 = arith.addf %50, %51 : vector<2x128xf32>
    %53 = arith.select %48, %52, %46 : vector<2x128xi1>, vector<2x128xf32>
    %54 = arith.cmpf oeq, %7, %5 : vector<2x128xf32>
    %55 = arith.andi %54, %42 : vector<2x128xi1>
    %56 = arith.subf %1, %3 : vector<2x128xf32>
    %57 = arith.mulf %56, %28 : vector<2x128xf32>
    %cst_21 = arith.constant 4.000000e+00 : f32
    %58 = vector.broadcast %cst_21 : f32 to vector<2x128xf32>
    %59 = arith.addf %57, %58 : vector<2x128xf32>
    %60 = arith.select %55, %59, %53 : vector<2x128xi1>, vector<2x128xf32>
    %cst_22 = arith.constant 0.166666672 : f32
    %61 = vector.broadcast %cst_22 : f32 to vector<2x128xf32>
    %62 = arith.mulf %60, %61 : vector<2x128xf32>
    %c0_23 = arith.constant 0 : index
    %c0_24 = arith.constant 0 : index
    %c0_25 = arith.constant 0 : index
    %c0_26 = arith.constant 0 : index
    %63 = vector.load %arg3[%c0_23, %c0_24, %c0_25, %c0_26] : memref<1x3x2x128xf32, #tpu.memory_space<vmem>>, vector<1x1x2x128xf32>
    %64 = vector.shape_cast %63 : vector<1x1x2x128xf32> to vector<2x128xf32>
    %65 = vector.shape_cast %62 : vector<2x128xf32> to vector<1x1x2x128xf32>
    tpu.vector_store %arg3[%c0_23, %c0_24, %c0_25, %c0_26], %65 {strides = array<i32>} : memref<1x3x2x128xf32, #tpu.memory_space<vmem>>, vector<1x1x2x128xf32>,
    %c0_27 = arith.constant 0 : index
    %c1_28 = arith.constant 1 : index
    %c0_29 = arith.constant 0 : index
    %c0_30 = arith.constant 0 : index
    %66 = vector.load %arg3[%c0_27, %c1_28, %c0_29, %c0_30] : memref<1x3x2x128xf32, #tpu.memory_space<vmem>>, vector<1x1x2x128xf32>
    %67 = vector.shape_cast %66 : vector<1x1x2x128xf32> to vector<2x128xf32>
    %68 = vector.shape_cast %33 : vector<2x128xf32> to vector<1x1x2x128xf32>
    tpu.vector_store %arg3[%c0_27, %c1_28, %c0_29, %c0_30], %68 {strides = array<i32>} : memref<1x3x2x128xf32, #tpu.memory_space<vmem>>, vector<1x1x2x128xf32>,
    %c0_31 = arith.constant 0 : index
    %c2_32 = arith.constant 2 : index
    %c0_33 = arith.constant 0 : index
    %c0_34 = arith.constant 0 : index
    %69 = vector.load %arg3[%c0_31, %c2_32, %c0_33, %c0_34] : memref<1x3x2x128xf32, #tpu.memory_space<vmem>>, vector<1x1x2x128xf32>
    %70 = vector.shape_cast %69 : vector<1x1x2x128xf32> to vector<2x128xf32>
    %71 = vector.shape_cast %7 : vector<2x128xf32> to vector<1x1x2x128xf32>
    tpu.vector_store %arg3[%c0_31, %c2_32, %c0_33, %c0_34], %71 {strides = array<i32>} : memref<1x3x2x128xf32, #tpu.memory_space<vmem>>, vector<1x1x2x128xf32>,
    return
  }
  func.func @transform_0(%arg0: i32, %arg1: i32) -> (i32, i32, i32, i32) {
    %c0_i32 = arith.constant 0 : i32
    %c0_i32_0 = arith.constant 0 : i32
    %c0_i32_1 = arith.constant 0 : i32
    return %arg0, %c0_i32, %arg1, %c0_i32_0 : i32, i32, i32, i32
  }
  func.func @transform_1(%arg0: i32, %arg1: i32) -> (i32, i32, i32, i32) {
    %c0_i32 = arith.constant 0 : i32
    %c0_i32_0 = arith.constant 0 : i32
    %c0_i32_1 = arith.constant 0 : i32
    return %arg0, %c0_i32, %arg1, %c0_i32_0 : i32, i32, i32, i32
  }
}

</mosaic_0001>

<llo_original>
// kernel: tpu_custom_call.1
$region0: #{tpu_custom_call.1}
  #allocation0 [shape = 'u32[]', space=smem, size = 0x4, offset = 0x4, fixed_abs, tag = 'smem constant byte address 0x4 - core index']
  #allocation1 [shape = 'u32[144,128]{1,0:T(1,128)}', space=vmem, size = 0x12000, scoped, tag = 'internal scratch']
  %s0 = inlined_call_operand.hbm [shape: f32[2,3,2,128], index: 0, kind: input, shape index: {}]
  %s1 = inlined_call_operand.hbm [shape: f32[2,3,2,128], index: 1, kind: output, shape index: {}]
  %s2 = sld [smem:[#allocation0]]
  $region41: #{tpu_custom_call.1} parent=0
    _
  %s4 = ssub.s32 1, %s2
  %s5 = scalar_select 0, %s4, %s2
  $region1: #{tpu_custom_call.1} parent=0
    #allocation2 [shape = 'u8[6144]{0}', space=vmem, size = 0x1800, scoped, tag = 'input window, operand 0']
    #allocation3 [shape = 's32[2]{0}', space=sflag, size = 0x8, scoped, tag = 'scoped memory for tpu_custom_call.1']
    #allocation4 [shape = 's32[2]{0}', space=sflag, size = 0x8, scoped, tag = 'scoped memory for tpu_custom_call.1']
    #allocation5 [shape = 'u8[6144]{0}', space=vmem, size = 0x1800, scoped, tag = 'output window, operand 0']
    %6 = vsyncpa [#allocation3], 0
    %s7 = scalar_lea.sflag [#allocation3], 1
    %8 = vsyncpa %s7, 0
    %9 = vsyncpa [#allocation4], 0
    %s10 = scalar_lea.sflag [#allocation4], 1
    %11 = vsyncpa %s10, 0
    loop: start=0, step=1, limit=4
    $region2: #{tpu_custom_call.1} parent=1 // loop_pre_header
      _
    $region3: #{tpu_custom_call.1} parent=1 // loop_header
      %s13 = sphi 0, %s17
      %p14 = scmp.ge.s32.totalorder %s13, 4
      %s20 = sphi 0, %s32
      %s21 = sphi 0, %s28
      %s22 = sphi 0, %s20
      %s23 = sphi 0, %s21
      %s24 = sphi 0, %s22
      %s25 = sphi 0, %s23
      %s37 = sphi 0, %s39
      %s40 = sphi 0, %s37
      %s41 = sphi 0, %s40
      %s57 = sphi 0, %s41
      %s65 = sphi 0, %s67
      %s68 = sphi 0, %s65
      %s69 = sphi 0, %s68
      %s85 = sphi 0, %s69
    $region4: #{tpu_custom_call.1} parent=1 // loop_header_branch
      %16 = sbr.rel (%p14) target = $region8
    $region5: #{tpu_custom_call.1} parent=1 // loop_body
      %s18 = ssub.s32 %s13, 1
      %s19 = ssub.s32 %s13, 2
      %s26 = sadd.s32 1, %s21
      %p27 = scmp.ge.s32.totalorder %s26, 1
      %s28 = scalar_select %p27, 0, %s26
      %s29 = sadd.s32 1, %s20
      %s30 = scalar_select %p27, %s29, %s20
      %p31 = scmp.ge.s32.totalorder %s30, 2
      %s32 = scalar_select %p31, 0, %s30
      %s33 = ssub.s32 %s20, %s32
      %s34 = ssub.s32 %s21, %s28
      %s35 = sor.u32 %s33, %s34
      %p36 = scmp.eq.s32.totalorder %s35, 0
      %s38 = sadd.s32 %s37, 1
      %s39 = scalar_select %p36, %s37, %s38
      %p42 = pneg %p36
      %p43 = scmp.eq.s32.totalorder %s13, 1
      %p44 = por %p42, %p43
      %p45 = scmp.ne.s32.totalorder %s37, %s40
      %p46 = scmp.eq.s32.totalorder %s13, 0
      %p47 = por %p45, %p46
      %p48 = scmp.ne.s32.totalorder %s37, %s40
      %p49 = scmp.eq.s32.totalorder %s18, 1
      %p50 = por %p48, %p49
      %p51 = scmp.ne.s32.totalorder %s40, %s41
      %p52 = scmp.eq.s32.totalorder %s18, 0
      %p53 = por %p51, %p52
      %p54 = scmp.ne.s32.totalorder %s40, %s41
      %p55 = scmp.eq.s32.totalorder %s19, 1
      %p56 = por %p54, %p55
      %p58 = scmp.ne.s32.totalorder %s41, %s57
      %p59 = scmp.eq.s32.totalorder %s19, 0
      %p60 = por %p58, %p59
      %s61 = ssub.s32 %s20, %s32
      %s62 = ssub.s32 %s21, %s28
      %s63 = sor.u32 %s61, %s62
      %p64 = scmp.eq.s32.totalorder %s63, 0
      %s66 = sadd.s32 %s65, 1
      %s67 = scalar_select %p64, %s65, %s66
      %p70 = pneg %p64
      %p71 = scmp.eq.s32.totalorder %s13, 1
      %p72 = por %p70, %p71
      %p73 = scmp.ne.s32.totalorder %s65, %s68
      %p74 = scmp.eq.s32.totalorder %s13, 0
      %p75 = por %p73, %p74
      %p76 = scmp.ne.s32.totalorder %s65, %s68
      %p77 = scmp.eq.s32.totalorder %s18, 1
      %p78 = por %p76, %p77
      %p79 = scmp.ne.s32.totalorder %s68, %s69
      %p80 = scmp.eq.s32.totalorder %s18, 0
      %p81 = por %p79, %p80
      %p82 = scmp.ne.s32.totalorder %s68, %s69
      %p83 = scmp.eq.s32.totalorder %s19, 1
      %p84 = por %p82, %p83
      %p86 = scmp.ne.s32.totalorder %s69, %s85
      %p87 = scmp.eq.s32.totalorder %s19, 0
      %p88 = por %p86, %p87
      %p89 = scmp.le.s32.totalorder 1, %s13
      %p90 = scmp.lt.s32.totalorder %s13, 3
      %p91 = pnand %p89, %p90
      %p92 = pneg %p91
      // Predicated region
      $region9: #{tpu_custom_call.1} parent=5 // pred_check
        _
      $region10: #{tpu_custom_call.1} parent=5 // pred_check_branch
        %94 = sbr.rel (%p91) target = $region12
      $region11: #{tpu_custom_call.1} parent=5 // pred_region
        %s95 = ssub.s32 %s13, 1
      $region12: #{tpu_custom_call.1} parent=5 // pred_fallthru
        _
      %p96 = scmp.lt.s32.totalorder %s13, 2
      // Predicated region
      $region13: #{tpu_custom_call.1} parent=5 // pred_check
        %p97 = pneg %p96
      $region14: #{tpu_custom_call.1} parent=5 // pred_check_branch
        %99 = sbr.rel (%p97) target = $region16
      $region15: #{tpu_custom_call.1} parent=5 // pred_region
        // Predicated region
        $region17: #{tpu_custom_call.1} parent=15 // pred_check
          %p100 = pneg %p47
        $region18: #{tpu_custom_call.1} parent=15 // pred_check_branch
          %102 = sbr.rel (%p100) target = $region20
        $region19: #{tpu_custom_call.1} parent=15 // pred_region
          %s103 = sand.u32 %s37, 1
          %s104 = scalar_lea.sflag [#allocation3], %s103
          %s105 = sand.u32 %s37, 1
          %s106 = smul.addr %s105, 6
          %s107 = scalar_lea.vmem [#allocation2], %s106
          %s109 = ssub.s32 96, 96
          %110 = vsyncadd %s104, %s109
          %s111 = smul.addr %s20, 3
          %s112 = sadd.s32 %s21, %s111
          %s113 = smul.addr %s112, 32
          %s114 = scalar_lea.hbm %s0, %s113
          %s115 = sshll.u32 %s107, 4
          %s116 = int_to_ptr.vmem [resolvable:$true] %s115
          %121 = dma.hbm_to_vmem [thread:$0]  %s114, 96, %s116, %s104, 32, 32, 2
        $region20: #{tpu_custom_call.1} parent=15 // pred_fallthru
          _
      $region16: #{tpu_custom_call.1} parent=5 // pred_fallthru
        _
      %p122 = scmp.le.s32.totalorder 1, %s13
      %p123 = scmp.lt.s32.totalorder %s13, 3
      %p124 = pnand %p122, %p123
      %p125 = pneg %p124
      // Predicated region
      $region21: #{tpu_custom_call.1} parent=5 // pred_check
        _
      $region22: #{tpu_custom_call.1} parent=5 // pred_check_branch
        %127 = sbr.rel (%p124) target = $region24
      $region23: #{tpu_custom_call.1} parent=5 // pred_region
        %s128 = ssub.s32 %s13, 1
        %s129 = sand.u32 %s40, 1
        %s130 = scalar_lea.sflag [#allocation3], %s129
        %s131 = sand.u32 %s40, 1
        %s132 = smul.addr %s131, 6
        %s133 = scalar_lea.vmem [#allocation2], %s132
        // Predicated region
        $region25: #{tpu_custom_call.1} parent=23 // pred_check
          %p134 = pneg %p53
        $region26: #{tpu_custom_call.1} parent=23 // pred_check_branch
          %136 = sbr.rel (%p134) target = $region28
        $region27: #{tpu_custom_call.1} parent=23 // pred_region
          %137 = dma.done %s130, 96
        $region28: #{tpu_custom_call.1} parent=23 // pred_fallthru
          _
        %s138 = sand.u32 %s40, 1
        %s139 = scalar_lea.sflag [#allocation3], %s138
        %s140 = sand.u32 %s40, 1
        %s141 = smul.addr %s140, 6
        %s142 = scalar_lea.vmem [#allocation2], %s141
        %p143 = pneg %p53
        %p144 = pneg %p50
        %p145 = pneg %p81
        %p146 = pneg %p78
        %s147 = sand.u32 %s68, 1
        %s148 = scalar_lea.sflag [#allocation4], %s147
        %s149 = sand.u32 %s68, 1
        %s150 = smul.addr %s149, 6
        %s151 = scalar_lea.vmem [#allocation5], %s150
        %v152 = vld [vmem:[%s133] sm:$0x3]
        %s153 = scalar_lea.vmem %s133, 2 [#allocation2]
        %v154 = vld [vmem:[%s153] sm:$0x3]
        %s155 = scalar_lea.vmem %s133, 4 [#allocation2]
        %v156 = vld [vmem:[%s155] sm:$0x3]
        %v157 = vmax.f32 %v152, %v154
        %v158 = vmax.f32 %v157, %v156
        %v159 = vmin.f32 %v152, %v154
        %v160 = vmin.f32 %v159, %v156
        %v161 = vsub.f32 %v158, %v160
        %vm162 = vcmp.gt.f32.partialorder %v158, 0.0
        %v163 = vsel %vm162, %v158, 1.0
        %vm164 = vcmp.gt.f32.partialorder %v161, 0.0
        %v165 = vsel %vm164, %v161, 1.0
        %v166 = vrcp.pop %v163
        %v167 = vmul.f32 %v163, %v166
        %v168 = vsub.f32 2.0, %v167
        %v169 = vmul.f32 %v166, %v168
        %v170 = vrcp.pop %v165
        %v171 = vmul.f32 %v165, %v170
        %v172 = vsub.f32 2.0, %v171
        %v173 = vmul.f32 %v170, %v172
        %v174 = vmul.f32 %v161, %v169
        %v175 = vsel %vm162, %v174, 0.0
        %v176 = vsub.f32 %v154, %v156
        %v177 = vmul.f32 %v176, %v173
        %vm178 = vcmp.lt.f32.partialorder %v177, 0.0
        %v179 = vadd.f32 %v177, 6.0
        %v180 = vsel %vm178, %v179, %v177
        %vm181 = vcmp.eq.f32.partialorder %v158, %v152
        %vm182 = vmand %vm181, %vm164
        %v183 = vsel %vm182, %v180, 0.0
        %vm184 = vcmp.eq.f32.partialorder %v158, %v154
        %vm185 = vmand %vm184, %vm164
        %v186 = vsub.f32 %v156, %v152
        %v187 = vmul.f32 %v186, %v173
        %v188 = vadd.f32 %v187, 2.0
        %v189 = vsel %vm185, %v188, %v183
        %vm190 = vcmp.eq.f32.partialorder %v158, %v156
        %vm191 = vmand %vm190, %vm164
        %v192 = vsub.f32 %v152, %v154
        %v193 = vmul.f32 %v192, %v173
        %v194 = vadd.f32 %v193, 4.0
        %v195 = vsel %vm191, %v194, %v189
        %v196 = vmul.f32 %v195, 0.16666667
        %197 = vst [vmem:[%s151] sm:$0x3] %v196
        %s198 = scalar_lea.vmem %s151, 2 [#allocation5]
        %199 = vst [vmem:[%s198] sm:$0x3] %v175
        %s200 = scalar_lea.vmem %s151, 4 [#allocation5]
        %201 = vst [vmem:[%s200] sm:$0x3] %v158
        %s202 = sand.u32 %s68, 1
        %s203 = scalar_lea.sflag [#allocation4], %s202
        %s204 = sand.u32 %s68, 1
        %s205 = smul.addr %s204, 6
        %s206 = scalar_lea.vmem [#allocation5], %s205
        // Predicated region
        $region29: #{tpu_custom_call.1} parent=23 // pred_check
          %p207 = pneg %p78
        $region30: #{tpu_custom_call.1} parent=23 // pred_check_branch
          %209 = sbr.rel (%p207) target = $region32
        $region31: #{tpu_custom_call.1} parent=23 // pred_region
          %s211 = ssub.s32 96, 96
          %212 = vsyncadd %s203, %s211
          %s213 = smul.addr %s22, 3
          %s214 = sadd.s32 %s23, %s213
          %s215 = smul.addr %s214, 32
          %s216 = scalar_lea.hbm %s1, %s215
          %s217 = sshll.u32 %s206, 4
          %s218 = int_to_ptr.vmem [resolvable:$true] %s217
          %223 = dma.vmem_to_hbm [thread:$0]  %s218, 96, %s216, %s203, 32, 32, 2
        $region32: #{tpu_custom_call.1} parent=23 // pred_fallthru
          _
      $region24: #{tpu_custom_call.1} parent=5 // pred_fallthru
        _
      %p224 = scmp.le.s32.totalorder 2, %s13
      // Predicated region
      $region33: #{tpu_custom_call.1} parent=5 // pred_check
        %p225 = pneg %p224
      $region34: #{tpu_custom_call.1} parent=5 // pred_check_branch
        %227 = sbr.rel (%p225) target = $region36
      $region35: #{tpu_custom_call.1} parent=5 // pred_region
        %s228 = ssub.s32 %s13, 2
        // Predicated region
        $region37: #{tpu_custom_call.1} parent=35 // pred_check
          %p229 = pneg %p84
        $region38: #{tpu_custom_call.1} parent=35 // pred_check_branch
          %231 = sbr.rel (%p229) target = $region40
        $region39: #{tpu_custom_call.1} parent=35 // pred_region
          %s232 = sand.u32 %s69, 1
          %s233 = scalar_lea.sflag [#allocation4], %s232
          %s234 = sand.u32 %s69, 1
          %s235 = smul.addr %s234, 6
          %s236 = scalar_lea.vmem [#allocation5], %s235
          %237 = dma.done %s233, 96
        $region40: #{tpu_custom_call.1} parent=35 // pred_fallthru
          _
      $region36: #{tpu_custom_call.1} parent=5 // pred_fallthru
        _
    $region6: #{tpu_custom_call.1} parent=1 // loop_footer
      %s17 = sadd.s32 1, %s13
    $region7: #{tpu_custom_call.1} parent=1 // loop_footer_branch
      %12 = sbr.rel target = $region3
    $region8: #{tpu_custom_call.1} parent=1 // loop_exit
      _
    %238 = vsyncpa [#allocation3], 1
    %s239 = scalar_lea.sflag [#allocation3], 1
    %240 = vsyncpa %s239, 1
    %241 = vsyncpa [#allocation4], 1
    %s242 = scalar_lea.sflag [#allocation4], 1
    %243 = vsyncpa %s242, 1

</llo_original>
